<compile_context>
chip_gen: v7x
topology: tpu7x:2x2x1
jax: 0.10.0
libtpu: 0.0.40
codegen_flags: <defaults>
</compile_context>

<pallas_src>
import functools

import jax
import jax.numpy as jnp
from jax.experimental import pallas as pl
from jax.experimental.pallas import tpu as pltpu


def _detection_head_kernel(x_hbm, w_ref, b_ref, out_ref, x_buf, col_ref, sem,
                           *, ts, win, wp, c_pad):
    # x_hbm:   (N, C_pad, Lpad)  padded + flattened input, raw HBM (pl.ANY)
    # w_ref:   (cout, 9*C_pad)   fused cls+reg weights (tap-major columns)
    # b_ref:   (cout, 1)         fused bias, f32
    # out_ref: (1, cout, ts)     lane-dense output tile
    # x_buf:   (2, C_pad, win)   double-buffered haloed input window (VMEM)
    # col_ref: (9*C_pad, ts)     im2col scratch = RHS of the single GEMM
    # sem:     (2,)              DMA completion semaphores
    n = pl.program_id(0)
    t = pl.program_id(1)
    n_tiles = pl.num_programs(1)
    slot = jax.lax.rem(t, 2)

    def start_fetch(tile, slot_):
        start = pl.multiple_of(tile * ts, 128)
        pltpu.make_async_copy(
            x_hbm.at[n, :, pl.ds(start, win)],
            x_buf.at[slot_],
            sem.at[slot_],
        ).start()

    def wait_fetch(slot_):
        # Shape-only descriptor; the semaphore identifies the in-flight copy.
        pltpu.make_async_copy(
            x_hbm.at[n, :, pl.ds(0, win)],
            x_buf.at[slot_],
            sem.at[slot_],
        ).wait()

    # First tile of this batch row: nothing is in flight yet -> fetch now.
    @pl.when(t == 0)
    def _():
        start_fetch(t, slot)          # t == 0 here, slot == 0

    wait_fetch(slot)

    # Prefetch the next tile's haloed window (same batch row) into the other
    # slot, overlapping its DMA with this tile's im2col + GEMM.
    @pl.when(t + 1 < n_tiles)
    def _():
        start_fetch(t + 1, 1 - slot)

    # im2col gather: 9 statically-offset slices of the haloed window.  Each
    # store is a full (C_pad, ts) slab at a native-aligned sublane offset.
    for tap in range(9):
        kh, kw = tap // 3, tap % 3
        off = kh * wp + kw
        col_ref[tap * c_pad:(tap + 1) * c_pad, :] = x_buf[slot, :, off:off + ts]

    # One fused GEMM for both heads and all 9 taps; f32 accumulation stays
    # inside the MXU.  Bias is added once in the epilogue store.
    acc = jnp.dot(w_ref[...], col_ref[...], preferred_element_type=jnp.float32)
    out_ref[0] = (acc + b_ref[...]).astype(out_ref.dtype)


def _round_up(x, m):
    return (x + m - 1) // m * m


def _sublane_tile(dtype):
    isz = jnp.dtype(dtype).itemsize
    return max(8, 8 * (4 // max(isz, 1)))       # 8 (f32), 16 (bf16), 32 (int8)


def _padded_tile_bytes(rows, cols, dtype):
    """VMEM footprint of a 2-D buffer after native (sublane, lane) padding."""
    isz = jnp.dtype(dtype).itemsize
    return _round_up(rows, _sublane_tile(dtype)) * _round_up(cols, 128) * isz


def _vmem_capacity_bytes():
    try:
        cap = int(getattr(pltpu.get_tpu_info(), "vmem_capacity_bytes", 0))
        if cap > 0:
            return cap
    except Exception:
        pass
    return 64 << 20   # conservative fallback: v7x has 64 MiB VMEM per TensorCore


def detection_head_forward(x_nchw, w_cls, b_cls, w_reg, b_reg, *,
                           tile_spatial=1024,
                           compute_dtype=jnp.bfloat16,
                           out_dtype=jnp.float32):
    """DSFD DetectionHead forward.  x: (N,C,H,W); w_*: (Cout,C,3,3); b_*: (Cout,)."""
    N, C, H, W = x_nchw.shape
    Ccls, Creg = w_cls.shape[0], w_reg.shape[0]
    cout = Ccls + Creg
    cdt = jnp.dtype(compute_dtype)
    odt = jnp.dtype(out_dtype)

    # Flattened, width-padded spatial coordinates: p = h*wp + w, wp = W + 2.
    wp = W + 2
    hwp = H * wp                                  # flat output extent we keep
    halo = 2 * wp + 2                             # max 3x3 tap offset

    # Lane-dense spatial tile (multiple of 128) and the haloed DMA window.
    ts = _round_up(min(tile_spatial, hwp), 128)
    n_tiles = pl.cdiv(hwp, ts)
    win = ts + _round_up(halo, 128)

    # Channel padding keeps every im2col store a full aligned slab.
    c_pad = _round_up(C, _sublane_tile(cdt))
    kdim = 9 * c_pad

    # ---- wrapper glue (single ~1x pass): zero-pad, flatten, cast ----------
    x_pad = jnp.pad(x_nchw.astype(cdt),
                    ((0, 0), (0, c_pad - C), (1, 1), (1, 1)))       # (N,Cp,H+2,W+2)
    x_flat = x_pad.reshape(N, c_pad, (H + 2) * wp)
    need = (n_tiles - 1) * ts + win               # every haloed window stays in range
    if need > x_flat.shape[-1]:
        x_flat = jnp.pad(x_flat, ((0, 0), (0, 0), (0, need - x_flat.shape[-1])))

    # Fused cls+reg weights as one (cout, 9*C_pad) GEMM LHS; column order
    # (tap-major, then channel) matches the im2col scratch layout.
    w_all = jnp.concatenate([w_cls, w_reg], axis=0)                 # (cout,C,3,3)
    w_all = jnp.pad(w_all, ((0, 0), (0, c_pad - C), (0, 0), (0, 0)))
    w_mat = jnp.transpose(w_all, (0, 2, 3, 1)).reshape(cout, kdim).astype(cdt)
    b_all = jnp.concatenate([b_cls, b_reg]).reshape(cout, 1).astype(jnp.float32)

    # ---- VMEM budget: padded tile footprints, capped per generation -------
    vmem_est = (2 * _padded_tile_bytes(c_pad, win, cdt)       # x double buffer
                + _padded_tile_bytes(kdim, ts, cdt)           # im2col scratch
                + 2 * _padded_tile_bytes(cout, kdim, cdt)     # weights
                + 2 * _padded_tile_bytes(cout, 1, jnp.float32)
                + 2 * _padded_tile_bytes(cout, ts, odt)       # output double buffer
                + _padded_tile_bytes(cout, ts, jnp.float32))  # f32 GEMM result
    vmem_limit = max(2 * vmem_est + (8 << 20), 32 << 20)
    vmem_limit = min(vmem_limit, _vmem_capacity_bytes() * 3 // 4)

    kernel = functools.partial(_detection_head_kernel,
                               ts=ts, win=win, wp=wp, c_pad=c_pad)

    out_flat = pl.pallas_call(
        kernel,
        out_shape=jax.ShapeDtypeStruct((N, cout, n_tiles * ts), odt),
        grid=(N, n_tiles),
        in_specs=[
            pl.BlockSpec(memory_space=pl.ANY),                    # x stays in HBM
            pl.BlockSpec((cout, kdim), lambda n, t: (0, 0)),      # resident weights
            pl.BlockSpec((cout, 1), lambda n, t: (0, 0)),         # resident bias
        ],
        out_specs=pl.BlockSpec((1, cout, ts), lambda n, t: (n, 0, t)),
        scratch_shapes=[
            pltpu.VMEM((2, c_pad, win), cdt),                     # haloed window x2
            pltpu.VMEM((kdim, ts), cdt),                          # im2col scratch
            pltpu.SemaphoreType.DMA((2,)),
        ],
        compiler_params=pltpu.CompilerParams(
            dimension_semantics=("parallel", "arbitrary"),
            vmem_limit_bytes=int(vmem_limit)),
    )(x_flat, w_mat, b_all)

    # (N, cout, T*ts) -> NCHW (drop the tail and the 2 padded columns/row).
    out = out_flat[:, :, :hwp].reshape(N, cout, H, wp)[:, :, :, :W]
    return out[:, :Ccls], out[:, Ccls:]


def _reference_forward(x, w_cls, b_cls, w_reg, b_reg):
    dn = ('NCHW', 'OIHW', 'NCHW')
    cls_ref = jax.lax.conv_general_dilated(
        x, w_cls, window_strides=(1, 1), padding='SAME',
        dimension_numbers=dn) + b_cls[None, :, None, None]
    reg_ref = jax.lax.conv_general_dilated(
        x, w_reg, window_strides=(1, 1), padding='SAME',
        dimension_numbers=dn) + b_reg[None, :, None, None]
    return cls_ref, reg_ref


if __name__ == "__main__":
    # Small, module-consistent shapes.
    N, C, H, W = 2, 4, 16, 16
    num_anchors = 6
    Ccls = num_anchors * 2      # 12
    Creg = num_anchors * 4      # 24

    key = jax.random.PRNGKey(0)
    kx, kwc, kbc, kwr, kbr = jax.random.split(key, 5)
    x = jax.random.normal(kx, (N, C, H, W), dtype=jnp.float32)
    w_cls = 0.1 * jax.random.normal(kwc, (Ccls, C, 3, 3), dtype=jnp.float32)
    b_cls = 0.1 * jax.random.normal(kbc, (Ccls,), dtype=jnp.float32)
    w_reg = 0.1 * jax.random.normal(kwr, (Creg, C, 3, 3), dtype=jnp.float32)
    b_reg = 0.1 * jax.random.normal(kbr, (Creg,), dtype=jnp.float32)

    cls_ref, reg_ref = _reference_forward(x, w_cls, b_cls, w_reg, b_reg)

    # 1) Exact f32 path with a small tile: exercises the multi-tile grid and
    #    the double-buffered haloed-window prefetch.
    cls_out, reg_out = detection_head_forward(
        x, w_cls, b_cls, w_reg, b_reg,
        tile_spatial=128, compute_dtype=jnp.float32, out_dtype=jnp.float32)
    jax.block_until_ready((cls_out, reg_out))
    assert cls_out.shape == (N, Ccls, H, W)
    assert reg_out.shape == (N, Creg, H, W)
    assert jnp.allclose(cls_out, cls_ref, atol=1e-4, rtol=1e-4)
    assert jnp.allclose(reg_out, reg_ref, atol=1e-4, rtol=1e-4)

    # 2) Default path: bf16 operands (f32 MXU accumulation) + bf16 writeback,
    #    checked against a bf16-cast reference.
    cls_bf, reg_bf = detection_head_forward(
        x, w_cls, b_cls, w_reg, b_reg, out_dtype=jnp.bfloat16)
    jax.block_until_ready((cls_bf, reg_bf))
    xb = x.astype(jnp.bfloat16).astype(jnp.float32)
    wcb = w_cls.astype(jnp.bfloat16).astype(jnp.float32)
    wrb = w_reg.astype(jnp.bfloat16).astype(jnp.float32)
    cls_rb, reg_rb = _reference_forward(xb, wcb, b_cls, wrb, b_reg)
    assert jnp.allclose(cls_bf.astype(jnp.float32), cls_rb, atol=3e-2, rtol=3e-2)
    assert jnp.allclose(reg_bf.astype(jnp.float32), reg_rb, atol=3e-2, rtol=3e-2)

    print("KERNEL_OK")
</pallas_src>

<mosaic_0001>
module attributes {stable_mosaic.version = 11 : i64} {
  func.func @_detection_head_kernel(%arg0: i32, %arg1: i32, %arg2: memref<2x8x512xf32, #tpu.memory_space<any>>, %arg3: memref<36x72xf32, #tpu.memory_space<vmem>>, %arg4: memref<36x1xf32, #tpu.memory_space<vmem>>, %arg5: memref<1x36x128xf32, #tpu.memory_space<vmem>>, %arg6: memref<2x8x256xf32, #tpu.memory_space<vmem>>, %arg7: memref<72x128xf32, #tpu.memory_space<vmem>>, %arg8: memref<2x!tpu.dma_semaphore, #tpu.memory_space<semaphore_mem>>) attributes {dimension_semantics = [#tpu.dimension_semantics<parallel>, #tpu.dimension_semantics<arbitrary>], iteration_bounds = array<i64: 2, 3>, scalar_prefetch = 0 : i64, scratch_operands = 3 : i64, tpu.core_type = #tpu.core_type<tc>, window_params = [{}, {pipeline_mode = #tpu.pipeline_mode<synchronous>, transform_indices = @transform_1, window_bounds = array<i64: 36, 72>}, {pipeline_mode = #tpu.pipeline_mode<synchronous>, transform_indices = @transform_2, window_bounds = array<i64: 36, 1>}, {transform_indices = @transform_3, window_bounds = array<i64: 1, 36, 128>}]} {
    %c2_i32 = arith.constant 2 : i32
    %0 = arith.remsi %arg1, %c2_i32 : i32
    %c0_i32 = arith.constant 0 : i32
    %1 = arith.cmpi eq, %arg1, %c0_i32 : i32
    %2 = arith.extui %1 : i1 to i32
    %c0_i32_0 = arith.constant 0 : i32
    %3 = arith.cmpi ne, %2, %c0_i32_0 : i32
    scf.if %3 {
      %c128_i32 = arith.constant 128 : i32
      %59 = arith.muli %arg1, %c128_i32 : i32
      %60 = tpu.assume_multiple %59, 128 : i32
      %c0_i32_34 = arith.constant 0 : i32
      %61 = tpu.memref_slice %arg2[%arg0, %c0_i32_34, %60] : memref<2x8x512xf32, #tpu.memory_space<any>> -> memref<1x8x256xf32, #tpu.memory_space<any>>
      %62 = tpu.memref_squeeze %61 : memref<1x8x256xf32, #tpu.memory_space<any>> -> memref<8x256xf32, #tpu.memory_space<any>>
      %c0_i32_35 = arith.constant 0 : i32
      %c0_i32_36 = arith.constant 0 : i32
      %63 = tpu.memref_slice %arg6[%0, %c0_i32_35, %c0_i32_36] : memref<2x8x256xf32, #tpu.memory_space<vmem>> -> memref<1x8x256xf32, #tpu.memory_space<vmem>>
      %64 = tpu.memref_squeeze %63 : memref<1x8x256xf32, #tpu.memory_space<vmem>> -> memref<8x256xf32, #tpu.memory_space<vmem>>
      %65 = tpu.memref_slice %arg8[%0] : memref<2x!tpu.dma_semaphore, #tpu.memory_space<semaphore_mem>> -> memref<1x!tpu.dma_semaphore, #tpu.memory_space<semaphore_mem>>
      %66 = tpu.memref_squeeze %65 : memref<1x!tpu.dma_semaphore, #tpu.memory_space<semaphore_mem>> -> memref<!tpu.dma_semaphore, #tpu.memory_space<semaphore_mem>>
      tpu.enqueue_dma source(%62 : memref<8x256xf32, #tpu.memory_space<any>>) target(%64 : memref<8x256xf32, #tpu.memory_space<vmem>>) target_semaphore(%66 : memref<!tpu.dma_semaphore, #tpu.memory_space<semaphore_mem>>)
    } else {
    }
    %c0_i32_1 = arith.constant 0 : i32
    %c0_i32_2 = arith.constant 0 : i32
    %4 = tpu.memref_slice %arg2[%arg0, %c0_i32_1, %c0_i32_2] : memref<2x8x512xf32, #tpu.memory_space<any>> -> memref<1x8x256xf32, #tpu.memory_space<any>>
    %5 = tpu.memref_squeeze %4 : memref<1x8x256xf32, #tpu.memory_space<any>> -> memref<8x256xf32, #tpu.memory_space<any>>
    %c0_i32_3 = arith.constant 0 : i32
    %c0_i32_4 = arith.constant 0 : i32
    %6 = tpu.memref_slice %arg6[%0, %c0_i32_3, %c0_i32_4] : memref<2x8x256xf32, #tpu.memory_space<vmem>> -> memref<1x8x256xf32, #tpu.memory_space<vmem>>
    %7 = tpu.memref_squeeze %6 : memref<1x8x256xf32, #tpu.memory_space<vmem>> -> memref<8x256xf32, #tpu.memory_space<vmem>>
    %8 = tpu.memref_slice %arg8[%0] : memref<2x!tpu.dma_semaphore, #tpu.memory_space<semaphore_mem>> -> memref<1x!tpu.dma_semaphore, #tpu.memory_space<semaphore_mem>>
    %9 = tpu.memref_squeeze %8 : memref<1x!tpu.dma_semaphore, #tpu.memory_space<semaphore_mem>> -> memref<!tpu.dma_semaphore, #tpu.memory_space<semaphore_mem>>
    tpu.wait_dma2 semaphore(%9 : memref<!tpu.dma_semaphore, #tpu.memory_space<semaphore_mem>>) src(%5 : memref<8x256xf32, #tpu.memory_space<any>>) dst(%7 : memref<8x256xf32, #tpu.memory_space<vmem>>)
    %c1_i32 = arith.constant 1 : i32
    %10 = arith.addi %arg1, %c1_i32 : i32
    %c3_i32 = arith.constant 3 : i32
    %11 = arith.cmpi slt, %10, %c3_i32 : i32
    %12 = arith.extui %11 : i1 to i32
    %c0_i32_5 = arith.constant 0 : i32
    %13 = arith.cmpi ne, %12, %c0_i32_5 : i32
    scf.if %13 {
      %c1_i32_34 = arith.constant 1 : i32
      %59 = arith.addi %arg1, %c1_i32_34 : i32
      %c1_i32_35 = arith.constant 1 : i32
      %60 = arith.subi %c1_i32_35, %0 : i32
      %c128_i32 = arith.constant 128 : i32
      %61 = arith.muli %59, %c128_i32 : i32
      %62 = tpu.assume_multiple %61, 128 : i32
      %c0_i32_36 = arith.constant 0 : i32
      %63 = tpu.memref_slice %arg2[%arg0, %c0_i32_36, %62] : memref<2x8x512xf32, #tpu.memory_space<any>> -> memref<1x8x256xf32, #tpu.memory_space<any>>
      %64 = tpu.memref_squeeze %63 : memref<1x8x256xf32, #tpu.memory_space<any>> -> memref<8x256xf32, #tpu.memory_space<any>>
      %c0_i32_37 = arith.constant 0 : i32
      %c0_i32_38 = arith.constant 0 : i32
      %65 = tpu.memref_slice %arg6[%60, %c0_i32_37, %c0_i32_38] : memref<2x8x256xf32, #tpu.memory_space<vmem>> -> memref<1x8x256xf32, #tpu.memory_space<vmem>>
      %66 = tpu.memref_squeeze %65 : memref<1x8x256xf32, #tpu.memory_space<vmem>> -> memref<8x256xf32, #tpu.memory_space<vmem>>
      %67 = tpu.memref_slice %arg8[%60] : memref<2x!tpu.dma_semaphore, #tpu.memory_space<semaphore_mem>> -> memref<1x!tpu.dma_semaphore, #tpu.memory_space<semaphore_mem>>
      %68 = tpu.memref_squeeze %67 : memref<1x!tpu.dma_semaphore, #tpu.memory_space<semaphore_mem>> -> memref<!tpu.dma_semaphore, #tpu.memory_space<semaphore_mem>>
      tpu.enqueue_dma source(%64 : memref<8x256xf32, #tpu.memory_space<any>>) target(%66 : memref<8x256xf32, #tpu.memory_space<vmem>>) target_semaphore(%68 : memref<!tpu.dma_semaphore, #tpu.memory_space<semaphore_mem>>)
    } else {
    }
    %14 = arith.index_cast %0 : i32 to index
    %c0 = arith.constant 0 : index
    %c0_6 = arith.constant 0 : index
    %15 = vector.load %arg6[%14, %c0, %c0_6] : memref<2x8x256xf32, #tpu.memory_space<vmem>>, vector<1x8x128xf32>
    %16 = vector.shape_cast %15 : vector<1x8x128xf32> to vector<8x128xf32>
    %c0_7 = arith.constant 0 : index
    %c0_8 = arith.constant 0 : index
    %17 = vector.load %arg7[%c0_7, %c0_8] : memref<72x128xf32, #tpu.memory_space<vmem>>, vector<8x128xf32>
    tpu.vector_store %arg7[%c0_7, %c0_8], %16 {strides = array<i32>} : memref<72x128xf32, #tpu.memory_space<vmem>>, vector<8x128xf32>,
    %18 = arith.index_cast %0 : i32 to index
    %c0_9 = arith.constant 0 : index
    %c1 = arith.constant 1 : index
    %19 = vector.load %arg6[%18, %c0_9, %c1] : memref<2x8x256xf32, #tpu.memory_space<vmem>>, vector<1x8x128xf32>
    %20 = vector.shape_cast %19 : vector<1x8x128xf32> to vector<8x128xf32>
    %c8 = arith.constant 8 : index
    %c0_10 = arith.constant 0 : index
    %21 = vector.load %arg7[%c8, %c0_10] : memref<72x128xf32, #tpu.memory_space<vmem>>, vector<8x128xf32>
    tpu.vector_store %arg7[%c8, %c0_10], %20 {strides = array<i32>} : memref<72x128xf32, #tpu.memory_space<vmem>>, vector<8x128xf32>,
    %22 = arith.index_cast %0 : i32 to index
    %c0_11 = arith.constant 0 : index
    %c2 = arith.constant 2 : index
    %23 = vector.load %arg6[%22, %c0_11, %c2] : memref<2x8x256xf32, #tpu.memory_space<vmem>>, vector<1x8x128xf32>
    %24 = vector.shape_cast %23 : vector<1x8x128xf32> to vector<8x128xf32>
    %c16 = arith.constant 16 : index
    %c0_12 = arith.constant 0 : index
    %25 = vector.load %arg7[%c16, %c0_12] : memref<72x128xf32, #tpu.memory_space<vmem>>, vector<8x128xf32>
    tpu.vector_store %arg7[%c16, %c0_12], %24 {strides = array<i32>} : memref<72x128xf32, #tpu.memory_space<vmem>>, vector<8x128xf32>,
    %26 = arith.index_cast %0 : i32 to index
    %c0_13 = arith.constant 0 : index
    %c18 = arith.constant 18 : index
    %27 = vector.load %arg6[%26, %c0_13, %c18] : memref<2x8x256xf32, #tpu.memory_space<vmem>>, vector<1x8x128xf32>
    %28 = vector.shape_cast %27 : vector<1x8x128xf32> to vector<8x128xf32>
    %c24 = arith.constant 24 : index
    %c0_14 = arith.constant 0 : index
    %29 = vector.load %arg7[%c24, %c0_14] : memref<72x128xf32, #tpu.memory_space<vmem>>, vector<8x128xf32>
    tpu.vector_store %arg7[%c24, %c0_14], %28 {strides = array<i32>} : memref<72x128xf32, #tpu.memory_space<vmem>>, vector<8x128xf32>,
    %30 = arith.index_cast %0 : i32 to index
    %c0_15 = arith.constant 0 : index
    %c19 = arith.constant 19 : index
    %31 = vector.load %arg6[%30, %c0_15, %c19] : memref<2x8x256xf32, #tpu.memory_space<vmem>>, vector<1x8x128xf32>
    %32 = vector.shape_cast %31 : vector<1x8x128xf32> to vector<8x128xf32>
    %c32 = arith.constant 32 : index
    %c0_16 = arith.constant 0 : index
    %33 = vector.load %arg7[%c32, %c0_16] : memref<72x128xf32, #tpu.memory_space<vmem>>, vector<8x128xf32>
    tpu.vector_store %arg7[%c32, %c0_16], %32 {strides = array<i32>} : memref<72x128xf32, #tpu.memory_space<vmem>>, vector<8x128xf32>,
    %34 = arith.index_cast %0 : i32 to index
    %c0_17 = arith.constant 0 : index
    %c20 = arith.constant 20 : index
    %35 = vector.load %arg6[%34, %c0_17, %c20] : memref<2x8x256xf32, #tpu.memory_space<vmem>>, vector<1x8x128xf32>
    %36 = vector.shape_cast %35 : vector<1x8x128xf32> to vector<8x128xf32>
    %c40 = arith.constant 40 : index
    %c0_18 = arith.constant 0 : index
    %37 = vector.load %arg7[%c40, %c0_18] : memref<72x128xf32, #tpu.memory_space<vmem>>, vector<8x128xf32>
    tpu.vector_store %arg7[%c40, %c0_18], %36 {strides = array<i32>} : memref<72x128xf32, #tpu.memory_space<vmem>>, vector<8x128xf32>,
    %38 = arith.index_cast %0 : i32 to index
    %c0_19 = arith.constant 0 : index
    %c36 = arith.constant 36 : index
    %39 = vector.load %arg6[%38, %c0_19, %c36] : memref<2x8x256xf32, #tpu.memory_space<vmem>>, vector<1x8x128xf32>
    %40 = vector.shape_cast %39 : vector<1x8x128xf32> to vector<8x128xf32>
    %c48 = arith.constant 48 : index
    %c0_20 = arith.constant 0 : index
    %41 = vector.load %arg7[%c48, %c0_20] : memref<72x128xf32, #tpu.memory_space<vmem>>, vector<8x128xf32>
    tpu.vector_store %arg7[%c48, %c0_20], %40 {strides = array<i32>} : memref<72x128xf32, #tpu.memory_space<vmem>>, vector<8x128xf32>,
    %42 = arith.index_cast %0 : i32 to index
    %c0_21 = arith.constant 0 : index
    %c37 = arith.constant 37 : index
    %43 = vector.load %arg6[%42, %c0_21, %c37] : memref<2x8x256xf32, #tpu.memory_space<vmem>>, vector<1x8x128xf32>
    %44 = vector.shape_cast %43 : vector<1x8x128xf32> to vector<8x128xf32>
    %c56 = arith.constant 56 : index
    %c0_22 = arith.constant 0 : index
    %45 = vector.load %arg7[%c56, %c0_22] : memref<72x128xf32, #tpu.memory_space<vmem>>, vector<8x128xf32>
    tpu.vector_store %arg7[%c56, %c0_22], %44 {strides = array<i32>} : memref<72x128xf32, #tpu.memory_space<vmem>>, vector<8x128xf32>,
    %46 = arith.index_cast %0 : i32 to index
    %c0_23 = arith.constant 0 : index
    %c38 = arith.constant 38 : index
    %47 = vector.load %arg6[%46, %c0_23, %c38] : memref<2x8x256xf32, #tpu.memory_space<vmem>>, vector<1x8x128xf32>
    %48 = vector.shape_cast %47 : vector<1x8x128xf32> to vector<8x128xf32>
    %c64 = arith.constant 64 : index
    %c0_24 = arith.constant 0 : index
    %49 = vector.load %arg7[%c64, %c0_24] : memref<72x128xf32, #tpu.memory_space<vmem>>, vector<8x128xf32>
    tpu.vector_store %arg7[%c64, %c0_24], %48 {strides = array<i32>} : memref<72x128xf32, #tpu.memory_space<vmem>>, vector<8x128xf32>,
    %c0_25 = arith.constant 0 : index
    %c0_26 = arith.constant 0 : index
    %50 = vector.load %arg3[%c0_25, %c0_26] : memref<36x72xf32, #tpu.memory_space<vmem>>, vector<36x72xf32>
    %c0_27 = arith.constant 0 : index
    %c0_28 = arith.constant 0 : index
    %51 = vector.load %arg7[%c0_27, %c0_28] : memref<72x128xf32, #tpu.memory_space<vmem>>, vector<72x128xf32>
    %cst = arith.constant dense<0.000000e+00> : vector<36x128xf32>
    %52 = tpu.matmul %50, %51, %cst {dimension_numbers = #tpu.dot_dimension_numbers<[1], [0], [0], [1], [0, 0, 1, 1], [], []>} : vector<36x72xf32>, vector<72x128xf32>, vector<36x128xf32> -> vector<36x128xf32>
    %c0_29 = arith.constant 0 : index
    %c0_30 = arith.constant 0 : index
    %53 = vector.load %arg4[%c0_29, %c0_30] : memref<36x1xf32, #tpu.memory_space<vmem>>, vector<36x1xf32>
    %54 = vector.broadcast %53 : vector<36x1xf32> to vector<36x128xf32>
    %55 = arith.addf %52, %54 : vector<36x128xf32>
    %c0_31 = arith.constant 0 : index
    %c0_32 = arith.constant 0 : index
    %c0_33 = arith.constant 0 : index
    %56 = vector.load %arg5[%c0_31, %c0_32, %c0_33] : memref<1x36x128xf32, #tpu.memory_space<vmem>>, vector<1x36x128xf32>
    %57 = vector.shape_cast %56 : vector<1x36x128xf32> to vector<36x128xf32>
    %58 = vector.shape_cast %55 : vector<36x128xf32> to vector<1x36x128xf32>
    tpu.vector_store %arg5[%c0_31, %c0_32, %c0_33], %58 {strides = array<i32>} : memref<1x36x128xf32, #tpu.memory_space<vmem>>, vector<1x36x128xf32>,
    return
  }
  func.func @transform_1(%arg0: i32, %arg1: i32) -> (i32, i32) {
    %c0_i32 = arith.constant 0 : i32
    %c0_i32_0 = arith.constant 0 : i32
    %c0_i32_1 = arith.constant 0 : i32
    return %c0_i32, %c0_i32_0 : i32, i32
  }
  func.func @transform_2(%arg0: i32, %arg1: i32) -> (i32, i32) {
    %c0_i32 = arith.constant 0 : i32
    %c0_i32_0 = arith.constant 0 : i32
    %c0_i32_1 = arith.constant 0 : i32
    return %c0_i32, %c0_i32_0 : i32, i32
  }
  func.func @transform_3(%arg0: i32, %arg1: i32) -> (i32, i32, i32) {
    %c0_i32 = arith.constant 0 : i32
    %c0_i32_0 = arith.constant 0 : i32
    return %arg0, %c0_i32, %arg1 : i32, i32, i32
  }
}

</mosaic_0001>

<llo_original>
// kernel: tpu_custom_call.1
$region0: #{tpu_custom_call.1}
  #allocation0 [shape = 'u32[]', space=smem, size = 0x4, offset = 0x4, fixed_abs, tag = 'smem constant byte address 0x4 - core index']
  #allocation1 [shape = 'u32[144,128]{1,0:T(1,128)}', space=vmem, size = 0x12000, scoped, tag = 'internal scratch']
  #allocation2 [shape = 'f32[2,8,256]{2,1,0:T(8,128)}', space=vmem, size = 0x4000, scoped, tag = 'scratch operand']
  #allocation3 [shape = 'f32[72,128]{1,0:T(8,128)}', space=vmem, size = 0x9000, scoped, tag = 'scratch operand']
  #allocation4 [shape = 's32[2]{0}', space=sflag, size = 0x8, scoped, tag = 'scratch operand']
  #allocation6 [shape = 's32[]', space=sflag, size = 0x4, offset = 0, fixed_abs, tag = 'sflag constant byte address 0x0 - dummy sync flag']
  #allocation7 [shape = 's32[]', space=sflag, size = 0x4, offset = 0, fixed_abs, tag = 'sflag constant byte address 0x0 - dummy sync flag']
  #allocation8 [shape = 'u32[]', space=smem, size = 0x4, offset = 0x44, fixed_abs, tag = 'smem constant byte address 0x44 - assertion arg 0']
  #allocation9 [shape = 'u32[]', space=smem, size = 0x4, offset = 0x48, fixed_abs, tag = 'smem constant byte address 0x48 - assertion arg 1']
  #allocation10 [shape = 's32[]', space=sflag, size = 0x4, offset = 0, fixed_abs, tag = 'sflag constant byte address 0x0 - dummy sync flag']
  #allocation11 [shape = 's32[]', space=sflag, size = 0x4, offset = 0, fixed_abs, tag = 'sflag constant byte address 0x0 - dummy sync flag']
  %s0 = inlined_call_operand.hbm [shape: f32[2,8,512], index: 0, kind: input, shape index: {}]
  %s1 = inlined_call_operand.vmem [shape: f32[36,72], index: 1, kind: input, shape index: {}]
  %s2 = inlined_call_operand.vmem [shape: f32[36,1], index: 2, kind: input, shape index: {}]
  %s3 = inlined_call_operand.vmem [shape: f32[2,36,384], index: 3, kind: output, shape index: {}]
  %s4 = sld [smem:[#allocation0]]
  $region91: #{tpu_custom_call.1} parent=0
    _
  %s6 = ssub.s32 1, %s4
  %s7 = scalar_select 0, %s6, %s4
  $region1: #{tpu_custom_call.1} parent=0
    #allocation5 [shape = 'u8[40960]{0}', space=vmem, size = 0xa000, scoped, tag = 'output window, operand 0']
    loop: start=0, step=1, limit=8
    $region2: #{tpu_custom_call.1} parent=1 // loop_pre_header
      _
    $region3: #{tpu_custom_call.1} parent=1 // loop_header
      %s9 = sphi 0, %s13
      %p10 = scmp.ge.s32.totalorder %s9, 8
      %s16 = sphi 0, %s28
      %s17 = sphi 0, %s24
      %s18 = sphi 0, %s16
      %s19 = sphi 0, %s17
      %s20 = sphi 0, %s18
      %s21 = sphi 0, %s19
      %s29 = sphi 0, %s29
      %s31 = sphi 0, %s29
      %s32 = sphi 0, %s31
      %s46 = sphi 0, %s32
      %s50 = sphi 0, %s50
      %s52 = sphi 0, %s50
      %s53 = sphi 0, %s52
      %s67 = sphi 0, %s53
      %s75 = sphi 0, %s77
      %s78 = sphi 0, %s75
      %s79 = sphi 0, %s78
      %s95 = sphi 0, %s79
    $region4: #{tpu_custom_call.1} parent=1 // loop_header_branch
      %12 = sbr.rel (%p10) target = $region8
    $region5: #{tpu_custom_call.1} parent=1 // loop_body
      %s14 = ssub.s32 %s9, 1
      %s15 = ssub.s32 %s9, 2
      %s22 = sadd.s32 1, %s17
      %p23 = scmp.ge.s32.totalorder %s22, 3
      %s24 = scalar_select %p23, 0, %s22
      %s25 = sadd.s32 1, %s16
      %s26 = scalar_select %p23, %s25, %s16
      %p27 = scmp.ge.s32.totalorder %s26, 2
      %s28 = scalar_select %p27, 0, %s26
      %s30 = sadd.s32 %s29, 1
      %p33 = scmp.eq.s32.totalorder %s9, 5
      %p34 = scmp.ne.s32.totalorder %s29, %s31
      %p35 = scmp.eq.s32.totalorder %s9, 0
      %p36 = por %p34, %p35
      %p37 = scmp.ne.s32.totalorder %s29, %s31
      %p38 = scmp.eq.s32.totalorder %s14, 5
      %p39 = por %p37, %p38
      %p40 = scmp.ne.s32.totalorder %s31, %s32
      %p41 = scmp.eq.s32.totalorder %s14, 0
      %p42 = por %p40, %p41
      %p43 = scmp.ne.s32.totalorder %s31, %s32
      %p44 = scmp.eq.s32.totalorder %s15, 5
      %p45 = por %p43, %p44
      %p47 = scmp.ne.s32.totalorder %s32, %s46
      %p48 = scmp.eq.s32.totalorder %s15, 0
      %p49 = por %p47, %p48
      %s51 = sadd.s32 %s50, 1
      %p54 = scmp.eq.s32.totalorder %s9, 5
      %p55 = scmp.ne.s32.totalorder %s50, %s52
      %p56 = scmp.eq.s32.totalorder %s9, 0
      %p57 = por %p55, %p56
      %p58 = scmp.ne.s32.totalorder %s50, %s52
      %p59 = scmp.eq.s32.totalorder %s14, 5
      %p60 = por %p58, %p59
      %p61 = scmp.ne.s32.totalorder %s52, %s53
      %p62 = scmp.eq.s32.totalorder %s14, 0
      %p63 = por %p61, %p62
      %p64 = scmp.ne.s32.totalorder %s52, %s53
      %p65 = scmp.eq.s32.totalorder %s15, 5
      %p66 = por %p64, %p65
      %p68 = scmp.ne.s32.totalorder %s53, %s67
      %p69 = scmp.eq.s32.totalorder %s15, 0
      %p70 = por %p68, %p69
      %s71 = ssub.s32 %s16, %s28
      %s72 = ssub.s32 %s17, %s24
      %s73 = sor.u32 %s71, %s72
      %p74 = scmp.eq.s32.totalorder %s73, 0
      %s76 = sadd.s32 %s75, 1
      %s77 = scalar_select %p74, %s75, %s76
      %p80 = pneg %p74
      %p81 = scmp.eq.s32.totalorder %s9, 5
      %p82 = por %p80, %p81
      %p83 = scmp.ne.s32.totalorder %s75, %s78
      %p84 = scmp.eq.s32.totalorder %s9, 0
      %p85 = por %p83, %p84
      %p86 = scmp.ne.s32.totalorder %s75, %s78
      %p87 = scmp.eq.s32.totalorder %s14, 5
      %p88 = por %p86, %p87
      %p89 = scmp.ne.s32.totalorder %s78, %s79
      %p90 = scmp.eq.s32.totalorder %s14, 0
      %p91 = por %p89, %p90
      %p92 = scmp.ne.s32.totalorder %s78, %s79
      %p93 = scmp.eq.s32.totalorder %s15, 5
      %p94 = por %p92, %p93
      %p96 = scmp.ne.s32.totalorder %s79, %s95
      %p97 = scmp.eq.s32.totalorder %s15, 0
      %p98 = por %p96, %p97
      %p99 = scmp.le.s32.totalorder 1, %s9
      %p100 = scmp.lt.s32.totalorder %s9, 7
      %p101 = pnand %p99, %p100
      %p102 = pneg %p101
      // Predicated region
      $region9: #{tpu_custom_call.1} parent=5 // pred_check
        _
      $region10: #{tpu_custom_call.1} parent=5 // pred_check_branch
        %104 = sbr.rel (%p101) target = $region12
      $region11: #{tpu_custom_call.1} parent=5 // pred_region
        %s105 = ssub.s32 %s9, 1
        // Predicated region
        $region13: #{tpu_custom_call.1} parent=11 // pred_check
          %p106 = pneg %p42
        $region14: #{tpu_custom_call.1} parent=11 // pred_check_branch
          %108 = sbr.rel (%p106) target = $region16
        $region15: #{tpu_custom_call.1} parent=11 // pred_region
          _
        $region16: #{tpu_custom_call.1} parent=11 // pred_fallthru
          _
        // Predicated region
        $region17: #{tpu_custom_call.1} parent=11 // pred_check
          %p109 = pneg %p63
        $region18: #{tpu_custom_call.1} parent=11 // pred_check_branch
          %111 = sbr.rel (%p109) target = $region20
        $region19: #{tpu_custom_call.1} parent=11 // pred_region
          _
        $region20: #{tpu_custom_call.1} parent=11 // pred_fallthru
          _
      $region12: #{tpu_custom_call.1} parent=5 // pred_fallthru
        _
      %p112 = scmp.lt.s32.totalorder %s9, 6
      // Predicated region
      $region21: #{tpu_custom_call.1} parent=5 // pred_check
        %p113 = pneg %p112
      $region22: #{tpu_custom_call.1} parent=5 // pred_check_branch
        %115 = sbr.rel (%p113) target = $region24
      $region23: #{tpu_custom_call.1} parent=5 // pred_region
        _
      $region24: #{tpu_custom_call.1} parent=5 // pred_fallthru
        _
      %p116 = scmp.le.s32.totalorder 1, %s9
      %p117 = scmp.lt.s32.totalorder %s9, 7
      %p118 = pnand %p116, %p117
      %p119 = pneg %p118
      // Predicated region
      $region25: #{tpu_custom_call.1} parent=5 // pred_check
        _
      $region26: #{tpu_custom_call.1} parent=5 // pred_check_branch
        %121 = sbr.rel (%p118) target = $region28
      $region27: #{tpu_custom_call.1} parent=5 // pred_region
        %s122 = ssub.s32 %s9, 1
        %p123 = pneg %p42
        %p124 = pneg %p39
        %p125 = pneg %p63
        %p126 = pneg %p60
        %p127 = pneg %p91
        %p128 = pneg %p88
        %s129 = sand.u32 %s78, 1
        %s130 = sand.u32 %s78, 1
        %s131 = smul.addr %s130, 40
        %s132 = scalar_lea.vmem [#allocation5], %s131
        %p133 = scmp.lt.s32.totalorder %s19, 0
        %s134 = ssub.s32 0, %s19
        %s135 = scalar_select %p133, %s134, %s19
        %s136 = sand.u32 %s135, 1
        %s137 = ssub.s32 0, %s136
        %s138 = scalar_select %p133, %s137, %s136
        %p139 = scmp.eq.s32.totalorder %s19, 0
        // Predicated region
        $region29: #{tpu_custom_call.1} parent=27 // pred_check
          %p140 = pneg %p139
        $region30: #{tpu_custom_call.1} parent=27 // pred_check_branch
          %142 = sbr.rel (%p140) target = $region32
        $region31: #{tpu_custom_call.1} parent=27 // pred_region
          %s143 = smul.u32 %s19, 128
          %s144 = sshra.s32 %s143, 7
          %s145 = sand.u32 %s143, 127
          %s146 = smul.u32 %s18, 4
          %s147 = sadd.s32 %s144, %s146
          %s148 = smul.addr %s147, 128
          %s149 = scalar_lea.hbm %s0, %s148
          %s150 = smul.u32 %s138, 2
          %s151 = smul.addr %s150, 8
          %s152 = scalar_lea.vmem [#allocation2], %s151
          %s153 = scalar_lea.sflag [#allocation4], %s138
          // Predicated region
          $region33: #{tpu_custom_call.1} parent=31 // pred_check
            _
          $region34: #{tpu_custom_call.1} parent=31 // pred_check_branch
            %155 = sbr.rel target = $region36
          $region35: #{tpu_custom_call.1} parent=31 // pred_region
            %156 = sst [smem:[#allocation8]] [#allocation7]
            %157 = sst [smem:[#allocation9]] [#allocation6]
          $region36: #{tpu_custom_call.1} parent=31 // pred_fallthru
            _
          %159 = shalt.err (0)
          %s161 = sshll.u32 %s152, 4
          %s162 = int_to_ptr.vmem [resolvable:$true] %s161
          %164 = dma.hbm_to_vmem [thread:$0]  %s149, 256, %s162, %s153
        $region32: #{tpu_custom_call.1} parent=27 // pred_fallthru
          _
        %s165 = smul.u32 %s138, 2
        %s166 = smul.addr %s165, 8
        %s167 = scalar_lea.vmem [#allocation2], %s166
        %s168 = scalar_lea.sflag [#allocation4], %s138
        %s169 = smul.u32 8, 1
        %s170 = smul.u32 %s169, 2
        %s171 = sshll.u32 %s170, 4
        %172 = dma.done %s168, %s171
        %s173 = sadd.s32 %s19, 1
        %p174 = scmp.lt.s32.totalorder %s173, 3
        // Predicated region
        $region37: #{tpu_custom_call.1} parent=27 // pred_check
          %p175 = pneg %p174
        $region38: #{tpu_custom_call.1} parent=27 // pred_check_branch
          %177 = sbr.rel (%p175) target = $region40
        $region39: #{tpu_custom_call.1} parent=27 // pred_region
          %s178 = ssub.s32 1, %s138
          %s179 = smul.u32 %s173, 128
          %s180 = sshra.s32 %s179, 7
          %s181 = sand.u32 %s179, 127
          %s182 = smul.u32 %s18, 4
          %s183 = sadd.s32 %s180, %s182
          %s184 = smul.addr %s183, 128
          %s185 = scalar_lea.hbm %s0, %s184
          %s186 = smul.u32 %s178, 2
          %s187 = smul.addr %s186, 8
          %s188 = scalar_lea.vmem [#allocation2], %s187
          %s189 = scalar_lea.sflag [#allocation4], %s178
          // Predicated region
          $region41: #{tpu_custom_call.1} parent=39 // pred_check
            _
          $region42: #{tpu_custom_call.1} parent=39 // pred_check_branch
            %191 = sbr.rel target = $region44
          $region43: #{tpu_custom_call.1} parent=39 // pred_region
            %192 = sst [smem:[#allocation8]] [#allocation11]
            %193 = sst [smem:[#allocation9]] [#allocation10]
          $region44: #{tpu_custom_call.1} parent=39 // pred_fallthru
            _
          %195 = shalt.err (0)
          %s197 = sshll.u32 %s188, 4
          %s198 = int_to_ptr.vmem [resolvable:$true] %s197
          %200 = dma.hbm_to_vmem [thread:$0]  %s185, 256, %s198, %s189
        $region40: #{tpu_custom_call.1} parent=27 // pred_fallthru
          _
        %v201 = vld [vmem:[%s167] sm:$0xff]
        %202 = vst [vmem:[#allocation3] sm:$0xff] %v201
        %v203 = vld [vmem:[%s167] sm:$0xff]
        %v204 = vld [vmem:[%s167 + $0x8] sm:$0xff]
        %207 = vrot.lane.b32.xlu0 %v203, 127
        %v208 = vpop.permute.xlu0 %207
        %209 = vrot.lane.b32.xlu0 %v204, 127
        %v210 = vpop.permute.xlu0 %209
        %vm211 = vcmask 1039360
        %v212 = vsel %vm211, %v208, %v210
        %214 = vst [vmem:[#allocation3 + $0x8] sm:$0xff] %v212
        %v215 = vld [vmem:[%s167] sm:$0xff]
        %v216 = vld [vmem:[%s167 + $0x8] sm:$0xff]
        %219 = vrot.lane.b32.xlu0 %v215, 126
        %v220 = vpop.permute.xlu0 %219
        %221 = vrot.lane.b32.xlu0 %v216, 126
        %v222 = vpop.permute.xlu0 %221
        %vm223 = vcmask 1031168
        %v224 = vsel %vm223, %v220, %v222
        %226 = vst [vmem:[#allocation3 + $0x10] sm:$0xff] %v224
        %v227 = vld [vmem:[%s167] sm:$0xff]
        %v228 = vld [vmem:[%s167 + $0x8] sm:$0xff]
        %231 = vrot.lane.b32.xlu0 %v227, 110
        %v232 = vpop.permute.xlu0 %231
        %233 = vrot.lane.b32.xlu0 %v228, 110
        %v234 = vpop.permute.xlu0 %233
        %vm235 = vcmask 900096
        %v236 = vsel %vm235, %v232, %v234
        %238 = vst [vmem:[#allocation3 + $0x18] sm:$0xff] %v236
        %v239 = vld [vmem:[%s167] sm:$0xff]
        %v240 = vld [vmem:[%s167 + $0x8] sm:$0xff]
        %243 = vrot.lane.b32.xlu0 %v239, 109
        %v244 = vpop.permute.xlu0 %243
        %245 = vrot.lane.b32.xlu0 %v240, 109
        %v246 = vpop.permute.xlu0 %245
        %vm247 = vcmask 891904
        %v248 = vsel %vm247, %v244, %v246
        %250 = vst [vmem:[#allocation3 + $0x20] sm:$0xff] %v248
        %v251 = vld [vmem:[%s167] sm:$0xff]
        %v252 = vld [vmem:[%s167 + $0x8] sm:$0xff]
        %255 = vrot.lane.b32.xlu0 %v251, 108
        %v256 = vpop.permute.xlu0 %255
        %257 = vrot.lane.b32.xlu0 %v252, 108
        %v258 = vpop.permute.xlu0 %257
        %vm259 = vcmask 883712
        %v260 = vsel %vm259, %v256, %v258
        %262 = vst [vmem:[#allocation3 + $0x28] sm:$0xff] %v260
        %v263 = vld [vmem:[%s167] sm:$0xff]
        %v264 = vld [vmem:[%s167 + $0x8] sm:$0xff]
        %267 = vrot.lane.b32.xlu0 %v263, 92
        %v268 = vpop.permute.xlu0 %267
        %269 = vrot.lane.b32.xlu0 %v264, 92
        %v270 = vpop.permute.xlu0 %269
        %vm271 = vcmask 752640
        %v272 = vsel %vm271, %v268, %v270
        %274 = vst [vmem:[#allocation3 + $0x30] sm:$0xff] %v272
        %v275 = vld [vmem:[%s167] sm:$0xff]
        %v276 = vld [vmem:[%s167 + $0x8] sm:$0xff]
        %279 = vrot.lane.b32.xlu0 %v275, 91
        %v280 = vpop.permute.xlu0 %279
        %281 = vrot.lane.b32.xlu0 %v276, 91
        %v282 = vpop.permute.xlu0 %281
        %vm283 = vcmask 744448
        %v284 = vsel %vm283, %v280, %v282
        %286 = vst [vmem:[#allocation3 + $0x38] sm:$0xff] %v284
        %v287 = vld [vmem:[%s167] sm:$0xff]
        %v288 = vld [vmem:[%s167 + $0x8] sm:$0xff]
        %291 = vrot.lane.b32.xlu0 %v287, 90
        %v292 = vpop.permute.xlu0 %291
        %293 = vrot.lane.b32.xlu0 %v288, 90
        %v294 = vpop.permute.xlu0 %293
        %vm295 = vcmask 736256
        %v296 = vsel %vm295, %v292, %v294
        %298 = vst [vmem:[#allocation3 + $0x40] sm:$0xff] %v296
        %v299 = vld [vmem:[%s1] sm:$0xff]
        %v300 = vld [vmem:[%s1 + $0x8] sm:$0xff]
        %v301 = vld [vmem:[%s1 + $0x10] sm:$0xff]
        %v302 = vld [vmem:[%s1 + $0x18] sm:$0xff]
        %v303 = vld [vmem:[%s1 + $0x20] sm:$0xf]
        %v304 = vld [vmem:[#allocation3] sm:$0xff]
        %v305 = vld [vmem:[#allocation3 + $0x8] sm:$0xff]
        %v306 = vld [vmem:[#allocation3 + $0x10] sm:$0xff]
        %v307 = vld [vmem:[#allocation3 + $0x18] sm:$0xff]
        %v308 = vld [vmem:[#allocation3 + $0x20] sm:$0xff]
        %v309 = vld [vmem:[#allocation3 + $0x28] sm:$0xff]
        %v310 = vld [vmem:[#allocation3 + $0x30] sm:$0xff]
        %v311 = vld [vmem:[#allocation3 + $0x38] sm:$0xff]
        %v312 = vld [vmem:[#allocation3 + $0x40] sm:$0xff]
        %v313 = vld [vmem:[%s2] sm:$0xff]
        %v314 = vld [vmem:[%s2 + $0x8] sm:$0xff]
        %v315 = vld [vmem:[%s2 + $0x10] sm:$0xff]
        %v316 = vld [vmem:[%s2 + $0x18] sm:$0xff]
        %v317 = vld [vmem:[%s2 + $0x20] sm:$0xf]
        %319 = vset.pattern.permute.xlu0 0
        %320 = vperm.xlu0 %319, %v313
        %v321 = vpop.permute.xlu0 %320
        %324 = vset.pattern.permute.xlu0 0
        %325 = vperm.xlu0 %324, %v314
        %v326 = vpop.permute.xlu0 %325
        %329 = vset.pattern.permute.xlu0 0
        %330 = vperm.xlu0 %329, %v315
        %v331 = vpop.permute.xlu0 %330
        %334 = vset.pattern.permute.xlu0 0
        %335 = vperm.xlu0 %334, %v316
        %v336 = vpop.permute.xlu0 %335
        %339 = vset.pattern.permute.xlu0 0
        %340 = vperm.xlu0 %339, %v317
        %v341 = vpop.permute.xlu0 %340
        %vm343 = vcmask 588800
        %v345 = vsel %vm343, %v299, 0
        %v348 = vsel %vm343, %v300, 0
        %v351 = vsel %vm343, %v301, 0
        %v354 = vsel %vm343, %v302, 0
        %v357 = vsel %vm343, %v303, 0
        %359 = vmatprep.subr.mxu0 0.0
        %360 = vmatpush1.msra.mxu0 %v304
        %361 = vmatprep.subr.mxu0 0.0
        %362 = vmatpush1.msra.mxu0 %v305
        %363 = vmatprep.subr.mxu0 0.0
        %364 = vmatpush1.msra.mxu0 %v306
        %365 = vmatprep.subr.mxu0 0.0
        %366 = vmatpush1.msra.mxu0 %v307
        %367 = vmatprep.subr.mxu0 0.0
        %368 = vmatpush1.msra.mxu0 %v308
        %369 = vmatprep.subr.mxu0 0.0
        %370 = vmatpush1.msra.mxu0 %v309
        %371 = vmatprep.subr.mxu0 0.0
        %372 = vmatpush1.msra.mxu0 %v310
        %373 = vmatprep.subr.mxu0 0.0
        %374 = vmatpush1.msra.mxu0 %v311
        %375 = vmatprep.subr.mxu0 0.0
        %376 = vmatpush1.msra.mxu0 %v312
        %377 = vmatprep.subr.mxu0 0.0
        %378 = vmatpush1.msra.mxu0 0.0
        %379 = vmatprep.subr.mxu0 0.0
        %380 = vmatpush1.msra.mxu0 0.0
        %381 = vmatprep.subr.mxu0 0.0
        %382 = vmatpush1.msra.mxu0 0.0
        %383 = vmatprep.subr.mxu0 0.0
        %384 = vmatpush1.msra.mxu0 0.0
        %385 = vmatprep.subr.mxu0 0.0
        %386 = vmatpush1.msra.mxu0 0.0
        %387 = vmatprep.subr.mxu0 0.0
        %388 = vmatpush1.msra.mxu0 0.0
        %389 = vmatprep.subr.mxu0 0.0
        %390 = vmatpush1.msra.mxu0 0.0
        %391 = vmatprep.subr.mxu0 0.0
        %392 = vmatpush1.msra.mxu0 0.0
        %393 = vmatprep.subr.mxu0 0.0
        %394 = vmatpush1.msra.mxu0 0.0
        %395 = vmatprep.subr.mxu0 0.0
        %396 = vmatpush1.msra.mxu0 0.0
        %397 = vmatprep.subr.mxu0 0.0
        %398 = vmatpush1.msra.mxu0 0.0
        %399 = vmatprep.subr.mxu0 0.0
        %400 = vmatpush1.msra.mxu0 0.0
        %401 = vmatprep.subr.mxu0 0.0
        %402 = vmatpush1.msra.mxu0 0.0
        %403 = vmatprep.subr.mxu0 0.0
        %404 = vmatpush1.msra.mxu0 0.0
        %405 = vmatprep.subr.mxu0 0.0
        %406 = vmatpush1.msra.mxu0 0.0
        %407 = vmatprep.subr.mxu0 0.0
        %408 = vmatpush1.msra.mxu0 0.0
        %409 = vmatprep.subr.mxu0 0.0
        %410 = vmatpush1.msra.mxu0 0.0
        %411 = vmatprep.subr.mxu0 0.0
        %412 = vmatpush1.msra.mxu0 0.0
        %413 = vmatprep.subr.mxu0 0.0
        %414 = vmatpush1.msra.mxu0 0.0
        %415 = vmatprep.subr.mxu0 0.0
        %416 = vmatpush1.msra.mxu0 0.0
        %417 = vmatprep.subr.mxu0 0.0
        %418 = vmatpush1.msra.mxu0 0.0
        %419 = vmatprep.subr.mxu0 0.0
        %420 = vmatpush1.msra.mxu0 0.0
        %421 = vmatprep.subr.mxu0 0.0
        %422 = vmatpush1.msra.mxu0 0.0
        %423 = vmatprep.mubr.f32.mxu0 0.0
        %424 = vmatmul.mubr.f32.gmra.mrb[0].mxu0 %v345
        %v425 = vpop.f32.mrb[0].mxu0
        %v426 = vadd.f32 %v321, %v425
        %v427 = vpop.f32.mrb[0].mxu0
        %428 = vmatprep.mubr.f32.mxu0 0.0
        %429 = vmatmul.mubr.f32.gmra.mrb[0].mxu0 %v348
        %v430 = vpop.f32.mrb[0].mxu0
        %v431 = vadd.f32 %v326, %v430
        %v432 = vpop.f32.mrb[0].mxu0
        %433 = vmatprep.mubr.f32.mxu0 0.0
        %434 = vmatmul.mubr.f32.gmra.mrb[0].mxu0 %v351
        %v435 = vpop.f32.mrb[0].mxu0
        %v436 = vadd.f32 %v331, %v435
        %v437 = vpop.f32.mrb[0].mxu0
        %438 = vmatprep.mubr.f32.mxu0 0.0
        %439 = vmatmul.mubr.f32.gmra.mrb[0].mxu0 %v354
        %v440 = vpop.f32.mrb[0].mxu0
        %v441 = vadd.f32 %v336, %v440
        %v442 = vpop.f32.mrb[0].mxu0
        %443 = vmatprep.mubr.f32.mxu0 0.0
        %444 = vmatmul.mubr.f32.gmra.mrb[0].mxu0 %v357
        %v445 = vpop.f32.mrb[0].mxu0
        %v446 = vadd.f32 %v341, %v445
        %v447 = vpop.f32.mrb[0].mxu0
        %448 = vdwg.mxu0
        %449 = vst [vmem:[%s132] sm:$0xff] %v426
        %450 = vst [vmem:[%s132 + $0x8] sm:$0xff] %v431
        %451 = vst [vmem:[%s132 + $0x10] sm:$0xff] %v436
        %452 = vst [vmem:[%s132 + $0x18] sm:$0xff] %v441
        %453 = vst [vmem:[%s132 + $0x20] sm:$0xf] %v446
        %s454 = sand.u32 %s78, 1
        %s455 = sand.u32 %s78, 1
        %s456 = smul.addr %s455, 40
        %s457 = scalar_lea.vmem [#allocation5], %s456
        // Predicated region
        $region45: #{tpu_custom_call.1} parent=27 // pred_check
          %p458 = pneg %p88
        $region46: #{tpu_custom_call.1} parent=27 // pred_check_branch
          %460 = sbr.rel (%p458) target = $region48
        $region47: #{tpu_custom_call.1} parent=27 // pred_region
          %s461 = smul.addr %s18, 15
          %s462 = sadd.s32 %s19, %s461
          %s463 = smul.addr %s462, 8
          %s464 = scalar_lea.vmem %s3, %s463
          // Predicated region
          $region49: #{tpu_custom_call.1} parent=47 // pred_check
            _
          $region50: #{tpu_custom_call.1} parent=47 // pred_check_branch
            %466 = sbr.rel (0) target = $region52
          $region51: #{tpu_custom_call.1} parent=47 // pred_region
            // Predicated region
            $region53: #{tpu_custom_call.1} parent=51 // pred_check
              _
            $region54: #{tpu_custom_call.1} parent=51 // pred_check_branch
              %468 = sbr.rel (0) target = $region56
            $region55: #{tpu_custom_call.1} parent=51 // pred_region
              // Predicated region
              $region68: #{tpu_custom_call.1} parent=55 // pred_check
                _
              $region69: #{tpu_custom_call.1} parent=55 // pred_check_branch
                %491 = sbr.rel (0) target = $region71
              $region70: #{tpu_custom_call.1} parent=55 // pred_region
                loop: start=0, step=1, limit=1
                $region72: #{tpu_custom_call.1} parent=70 // loop_pre_header
                  _
                $region73: #{tpu_custom_call.1} parent=70 // loop_header
                  %s493 = sphi 0, %s497
                  %p494 = scmp.ge.s32.totalorder %s493, 1
                  %s498 = sphi %s457, %s457
                  %s499 = sphi %s464, %s464
                $region74: #{tpu_custom_call.1} parent=70 // loop_header_branch
                  %496 = sbr.rel (%p494) target = $region78
                $region75: #{tpu_custom_call.1} parent=70 // loop_body
                  %v500 = vld [vmem:[%s498] sm:$0xff]
                  %501 = vst [vmem:[%s499] sm:$0xff] %v500
                  %v502 = vld [vmem:[%s498 + $0x8] sm:$0xff]
                  %503 = vst [vmem:[%s499 + $0x18] sm:$0xff] %v502
                  %v504 = vld [vmem:[%s498 + $0x10] sm:$0xff]
                  %505 = vst [vmem:[%s499 + $0x30] sm:$0xff] %v504
                  %v506 = vld [vmem:[%s498 + $0x18] sm:$0xff]
                  %507 = vst [vmem:[%s499 + $0x48] sm:$0xff] %v506
                  %v508 = vld [vmem:[%s498 + $0x20] sm:$0xff]
                  %509 = vst [vmem:[%s499 + $0x60] sm:$0xff] %v508
                $region76: #{tpu_custom_call.1} parent=70 // loop_footer
                  %s497 = sadd.s32 1, %s493
                $region77: #{tpu_custom_call.1} parent=70 // loop_footer_branch
                  %492 = sbr.rel target = $region73
                $region78: #{tpu_custom_call.1} parent=70 // loop_exit
                  _
              $region71: #{tpu_custom_call.1} parent=55 // pred_fallthru
                _
              // Predicated region
              $region79: #{tpu_custom_call.1} parent=55 // pred_check
                _
              $region80: #{tpu_custom_call.1} parent=55 // pred_check_branch
                %511 = sbr.rel target = $region82
              $region81: #{tpu_custom_call.1} parent=55 // pred_region
                _
              $region82: #{tpu_custom_call.1} parent=55 // pred_fallthru
                _
            $region56: #{tpu_custom_call.1} parent=51 // pred_fallthru
              _
            // Predicated region
            $region57: #{tpu_custom_call.1} parent=51 // pred_check
              _
            $region58: #{tpu_custom_call.1} parent=51 // pred_check_branch
              %470 = sbr.rel target = $region60
            $region59: #{tpu_custom_call.1} parent=51 // pred_region
              loop: start=0, step=1, limit=1
              $region61: #{tpu_custom_call.1} parent=59 // loop_pre_header
                _
              $region62: #{tpu_custom_call.1} parent=59 // loop_header
                %s473 = sphi 0, %s477
                %p474 = scmp.ge.s32.totalorder %s473, 1
                %s478 = sphi %s457, %s457
                %s479 = sphi %s464, %s464
              $region63: #{tpu_custom_call.1} parent=59 // loop_header_branch
                %476 = sbr.rel (%p474) target = $region67
              $region64: #{tpu_custom_call.1} parent=59 // loop_body
                %v480 = vld [vmem:[%s478] sm:$0xff]
                %481 = vst [vmem:[%s479] sm:$0xff] %v480
                %v482 = vld [vmem:[%s478 + $0x8] sm:$0xff]
                %483 = vst [vmem:[%s479 + $0x18] sm:$0xff] %v482
                %v484 = vld [vmem:[%s478 + $0x10] sm:$0xff]
                %485 = vst [vmem:[%s479 + $0x30] sm:$0xff] %v484
                %v486 = vld [vmem:[%s478 + $0x18] sm:$0xff]
                %487 = vst [vmem:[%s479 + $0x48] sm:$0xff] %v486
                %v488 = vld [vmem:[%s478 + $0x20] sm:$0xff]
                %489 = vst [vmem:[%s479 + $0x60] sm:$0xff] %v488
              $region65: #{tpu_custom_call.1} parent=59 // loop_footer
                %s477 = sadd.s32 1, %s473
              $region66: #{tpu_custom_call.1} parent=59 // loop_footer_branch
                %472 = sbr.rel target = $region62
              $region67: #{tpu_custom_call.1} parent=59 // loop_exit
                _
            $region60: #{tpu_custom_call.1} parent=51 // pred_fallthru
              _
          $region52: #{tpu_custom_call.1} parent=47 // pred_fallthru
            _
          %512 = vnop
        $region48: #{tpu_custom_call.1} parent=27 // pred_fallthru
          _
      $region28: #{tpu_custom_call.1} parent=5 // pred_fallthru
        _
      %p513 = scmp.le.s32.totalorder 2, %s9
      // Predicated region
      $region83: #{tpu_custom_call.1} parent=5 // pred_check
        %p514 = pneg %p513
      $region84: #{tpu_custom_call.1} parent=5 // pred_check_branch
        %516 = sbr.rel (%p514) target = $region86
      $region85: #{tpu_custom_call.1} parent=5 // pred_region
        %s517 = ssub.s32 %s9, 2
        // Predicated region
        $region87: #{tpu_custom_call.1} parent=85 // pred_check
          %p518 = pneg %p94
        $region88: #{tpu_custom_call.1} parent=85 // pred_check_branch
          %520 = sbr.rel (%p518) target = $region90
        $region89: #{tpu_custom_call.1} parent=85 // pred_region
          %s521 = sand.u32 %s79, 1
          %s522 = sand.u32 %s79, 1
          %s523 = smul.addr %s522, 40
          %s524 = scalar_lea.vmem [#allocation5], %s523
        $region90: #{tpu_custom_call.1} parent=85 // pred_fallthru
          _
      $region86: #{tpu_custom_call.1} parent=5 // pred_fallthru
        _
    $region6: #{tpu_custom_call.1} parent=1 // loop_footer
      %s13 = sadd.s32 1, %s9
    $region7: #{tpu_custom_call.1} parent=1 // loop_footer_branch
      %8 = sbr.rel target = $region3
    $region8: #{tpu_custom_call.1} parent=1 // loop_exit
      _
  %525 = vsyncmov [#allocation4]
  %s526 = vpop.sfrf %525
  %p527 = scmp.eq.s32.totalorder %s526, 0
  %p528 = pneg %p527
  %530 = shalt.err (%p528)
  %s531 = scalar_lea.sflag [#allocation4], 1
  %532 = vsyncmov %s531
  %s533 = vpop.sfrf %532
  %p534 = scmp.eq.s32.totalorder %s533, 0
  %p535 = pneg %p534
  %537 = shalt.err (%p535)

</llo_original>
